<compile_context>
chip_gen: v7x
topology: tpu7x:2x2x1
jax: 0.10.0
libtpu: 0.0.40
codegen_flags: <defaults>
</compile_context>

<pallas_src>
import math

import jax
import jax.numpy as jnp
from jax.experimental import pallas as pl
from jax.experimental.pallas import tpu as pltpu


def _sq_err_rowsum_kernel(x_ref, y_ref, o_ref):
    """o[r, 0] = sum_c (x[r, c] - y[r, c])**2 for the (TM, C) tile."""
    x = x_ref[...].astype(jnp.float32)
    y = y_ref[...].astype(jnp.float32)
    d = x - y
    o_ref[...] = jnp.sum(d * d, axis=1, keepdims=True).astype(o_ref.dtype)


def _pick_row_tile(n_rows, n_cols, vmem_budget_bytes=8 << 20):
    """Rows per block: 2 inputs x 2 pipeline buffers x TM*C*4B <= budget."""
    if n_rows <= 128:
        # Single full-extent block: no (8,128) divisibility requirement,
        # no padding needed.
        return n_rows
    bytes_per_row = 2 * 2 * n_cols * 4          # double-buffered, f32-sized
    tm = vmem_budget_bytes // max(bytes_per_row, 1)
    tm = min(tm, 2048, n_rows)
    tm = (tm // 128) * 128                      # sublane- and lane-aligned
    return max(tm, 128)


def loss_function(x, y):
    """Pallas implementation of Loss_Function.forward(x, y) = ((x - y)**2).sum(dim=2)."""
    assert x.shape == y.shape, (x.shape, y.shape)
    assert x.ndim >= 3, "sum(dim=2) requires rank >= 3 inputs"
    out_dtype = jnp.promote_types(x.dtype, y.dtype)

    # Move the reduction axis (PyTorch dim=2) to the last position so it maps
    # onto the lane dimension.  For the common 3-D (B, S, C) case this is a
    # no-op (dim=2 is already last).
    xm = jnp.moveaxis(x, 2, -1)
    ym = jnp.moveaxis(y, 2, -1)
    lead_shape = xm.shape[:-1]
    C = xm.shape[-1]
    N = int(math.prod(lead_shape))

    x2 = xm.reshape(N, C)
    y2 = ym.reshape(N, C)

    tm = _pick_row_tile(N, C)
    n_pad = (-N) % tm
    if n_pad:
        # Zero-padded rows contribute (0-0)^2 = 0 and are sliced off below.
        x2 = jnp.pad(x2, ((0, n_pad), (0, 0)))
        y2 = jnp.pad(y2, ((0, n_pad), (0, 0)))
    n_rows = N + n_pad
    grid = (n_rows // tm,)

    out = pl.pallas_call(
        _sq_err_rowsum_kernel,
        out_shape=jax.ShapeDtypeStruct((n_rows, 1), out_dtype),
        grid_spec=pltpu.PrefetchScalarGridSpec(
            num_scalar_prefetch=0,
            grid=grid,
            in_specs=[
                pl.BlockSpec((tm, C), lambda i: (i, 0)),
                pl.BlockSpec((tm, C), lambda i: (i, 0)),
            ],
            out_specs=pl.BlockSpec((tm, 1), lambda i: (i, 0)),
        ),
        compiler_params=pltpu.CompilerParams(
            # Each block writes its own output rows -> independent grid steps,
            # so the axis can be sharded across TensorCores (v7x megacore).
            dimension_semantics=("parallel",),
        ),
    )(x2, y2)

    return out[:N, 0].reshape(lead_shape)


def _reference(x, y):
    return jnp.sum((x.astype(jnp.float32) - y.astype(jnp.float32)) ** 2, axis=2)


if __name__ == "__main__":
    key = jax.random.PRNGKey(0)

    # Small primary test: (B, S, C) = (2, 16, 128), single-block path.
    k1, k2, k3, k4 = jax.random.split(key, 4)
    B, S, C = 2, 16, 128
    x = jax.random.normal(k1, (B, S, C), dtype=jnp.float32)
    y = jax.random.normal(k2, (B, S, C), dtype=jnp.float32)

    out = loss_function(x, y)
    out = jax.block_until_ready(out)
    ref = _reference(x, y)
    assert out.shape == (B, S), out.shape
    assert jnp.allclose(out, ref, rtol=1e-5, atol=1e-5), (out, ref)

    # Second test exercises the multi-block + row-padding path (N=300, TM=128).
    B2, S2, C2 = 3, 100, 256
    x2 = jax.random.normal(k3, (B2, S2, C2), dtype=jnp.float32)
    y2 = jax.random.normal(k4, (B2, S2, C2), dtype=jnp.float32)

    out2 = loss_function(x2, y2)
    out2 = jax.block_until_ready(out2)
    ref2 = _reference(x2, y2)
    assert out2.shape == (B2, S2), out2.shape
    assert jnp.allclose(out2, ref2, rtol=1e-5, atol=1e-5), (out2, ref2)

    print("KERNEL_OK")
</pallas_src>

<mosaic_0001>
module attributes {stable_mosaic.version = 11 : i64} {
  func.func @_sq_err_rowsum_kernel(%arg0: i32, %arg1: memref<32x128xf32, #tpu.memory_space<vmem>>, %arg2: memref<32x128xf32, #tpu.memory_space<vmem>>, %arg3: memref<32x1xf32, #tpu.memory_space<vmem>>) attributes {dimension_semantics = [#tpu.dimension_semantics<parallel>], iteration_bounds = array<i64: 1>, scalar_prefetch = 0 : i64, scratch_operands = 0 : i64, tpu.core_type = #tpu.core_type<tc>, window_params = [{transform_indices = @transform_0, window_bounds = array<i64: 32, 128>}, {transform_indices = @transform_1, window_bounds = array<i64: 32, 128>}, {transform_indices = @transform_2, window_bounds = array<i64: 32, 1>}]} {
    %c0 = arith.constant 0 : index
    %c0_0 = arith.constant 0 : index
    %0 = vector.load %arg1[%c0, %c0_0] : memref<32x128xf32, #tpu.memory_space<vmem>>, vector<32x128xf32>
    %c0_1 = arith.constant 0 : index
    %c0_2 = arith.constant 0 : index
    %1 = vector.load %arg2[%c0_1, %c0_2] : memref<32x128xf32, #tpu.memory_space<vmem>>, vector<32x128xf32>
    %2 = arith.subf %0, %1 : vector<32x128xf32>
    %3 = arith.mulf %2, %2 : vector<32x128xf32>
    %cst = arith.constant dense<0.000000e+00> : vector<32xf32>
    %4 = vector.multi_reduction <add>, %3, %cst [1] : vector<32x128xf32> to vector<32xf32>
    %5 = vector.shape_cast %4 : vector<32xf32> to vector<32x1xf32>
    %c0_3 = arith.constant 0 : index
    %c0_4 = arith.constant 0 : index
    %6 = vector.load %arg3[%c0_3, %c0_4] : memref<32x1xf32, #tpu.memory_space<vmem>>, vector<32x1xf32>
    tpu.vector_store %arg3[%c0_3, %c0_4], %5 {strides = array<i32>} : memref<32x1xf32, #tpu.memory_space<vmem>>, vector<32x1xf32>,
    return
  }
  func.func @transform_0(%arg0: i32) -> (i32, i32) {
    %c0_i32 = arith.constant 0 : i32
    %c0_i32_0 = arith.constant 0 : i32
    return %arg0, %c0_i32 : i32, i32
  }
  func.func @transform_1(%arg0: i32) -> (i32, i32) {
    %c0_i32 = arith.constant 0 : i32
    %c0_i32_0 = arith.constant 0 : i32
    return %arg0, %c0_i32 : i32, i32
  }
  func.func @transform_2(%arg0: i32) -> (i32, i32) {
    %c0_i32 = arith.constant 0 : i32
    %c0_i32_0 = arith.constant 0 : i32
    return %arg0, %c0_i32 : i32, i32
  }
}

</mosaic_0001>

<llo_original>
// kernel: tpu_custom_call.1
$region0: #{tpu_custom_call.1}
  #allocation0 [shape = 'u32[]', space=smem, size = 0x4, offset = 0x4, fixed_abs, tag = 'smem constant byte address 0x4 - core index']
  #allocation1 [shape = 'u32[144,128]{1,0:T(1,128)}', space=vmem, size = 0x12000, scoped, tag = 'internal scratch']
  %s0 = inlined_call_operand.hbm [shape: f32[32,128], index: 0, kind: input, shape index: {}]
  %s1 = inlined_call_operand.hbm [shape: f32[32,128], index: 1, kind: input, shape index: {}]
  %s2 = inlined_call_operand.vmem [shape: f32[32,1], index: 2, kind: output, shape index: {}]
  %s3 = sld [smem:[#allocation0]]
  $region26: #{tpu_custom_call.1} parent=0
    _
  %s5 = ssub.s32 1, %s3
  %s6 = scalar_select 0, %s5, %s3
  $region1: #{tpu_custom_call.1} parent=0
    #allocation2 [shape = 'u8[16384]{0}', space=vmem, size = 0x4000, scoped, tag = 'input window, operand 0, single buffered']
    #allocation3 [shape = 's32[1]{0}', space=sflag, size = 0x4, scoped, tag = 'scoped memory for tpu_custom_call.1']
    #allocation4 [shape = 'u8[16384]{0}', space=vmem, size = 0x4000, scoped, tag = 'input window, operand 1, single buffered']
    #allocation5 [shape = 's32[1]{0}', space=sflag, size = 0x4, scoped, tag = 'scoped memory for tpu_custom_call.1']
    %7 = vsyncpa [#allocation3], 0
    %8 = vsyncpa [#allocation5], 0
    // Predicated region
    $region2: #{tpu_custom_call.1} parent=1 // pred_check
      _
    $region3: #{tpu_custom_call.1} parent=1 // pred_check_branch
      %10 = sbr.rel (0) target = $region5
    $region4: #{tpu_custom_call.1} parent=1 // pred_region
      %s12 = ssub.s32 512, 512
      %13 = vsyncadd [#allocation3], %s12
      %s14 = sshll.u32 [#allocation2], 4
      %s15 = int_to_ptr.vmem [resolvable:$true] %s14
      %20 = dma.hbm_to_vmem [thread:$0]  %s0, 512, %s15, [#allocation3], 128, 128, 8
    $region5: #{tpu_custom_call.1} parent=1 // pred_fallthru
      _
    // Predicated region
    $region6: #{tpu_custom_call.1} parent=1 // pred_check
      _
    $region7: #{tpu_custom_call.1} parent=1 // pred_check_branch
      %22 = sbr.rel (0) target = $region9
    $region8: #{tpu_custom_call.1} parent=1 // pred_region
      %s24 = ssub.s32 512, 512
      %25 = vsyncadd [#allocation5], %s24
      %s26 = sshll.u32 [#allocation4], 4
      %s27 = int_to_ptr.vmem [resolvable:$true] %s26
      %32 = dma.hbm_to_vmem [thread:$0]  %s1, 512, %s27, [#allocation5], 128, 128, 8
    $region9: #{tpu_custom_call.1} parent=1 // pred_fallthru
      _
    // Predicated region
    $region10: #{tpu_custom_call.1} parent=1 // pred_check
      _
    $region11: #{tpu_custom_call.1} parent=1 // pred_check_branch
      %34 = sbr.rel (0) target = $region13
    $region12: #{tpu_custom_call.1} parent=1 // pred_region
      %35 = dma.done [#allocation3], 512
    $region13: #{tpu_custom_call.1} parent=1 // pred_fallthru
      _
    // Predicated region
    $region14: #{tpu_custom_call.1} parent=1 // pred_check
      _
    $region15: #{tpu_custom_call.1} parent=1 // pred_check_branch
      %37 = sbr.rel (0) target = $region17
    $region16: #{tpu_custom_call.1} parent=1 // pred_region
      %38 = dma.done [#allocation5], 512
    $region17: #{tpu_custom_call.1} parent=1 // pred_fallthru
      _
    %v39 = vld [vmem:[#allocation2] sm:$0xff]
    %v40 = vld [vmem:[#allocation2 + $0x8] sm:$0xff]
    %v41 = vld [vmem:[#allocation2 + $0x10] sm:$0xff]
    %v42 = vld [vmem:[#allocation2 + $0x18] sm:$0xff]
    %v43 = vld [vmem:[#allocation4] sm:$0xff]
    %v44 = vld [vmem:[#allocation4 + $0x8] sm:$0xff]
    %v45 = vld [vmem:[#allocation4 + $0x10] sm:$0xff]
    %v46 = vld [vmem:[#allocation4 + $0x18] sm:$0xff]
    %v47 = vsub.f32 %v39, %v43
    %v48 = vsub.f32 %v40, %v44
    %v49 = vsub.f32 %v41, %v45
    %v50 = vsub.f32 %v42, %v46
    %v51 = vmul.f32 %v47, %v47
    %v52 = vmul.f32 %v48, %v48
    %v53 = vmul.f32 %v49, %v49
    %v54 = vmul.f32 %v50, %v50
    %55 = vadd.xlane.f32.xlu0 %v51
    %v56 = vpop.xlane.xlu0 %55
    %57 = vadd.xlane.f32.xlu0 %v52
    %v58 = vpop.xlane.xlu0 %57
    %59 = vadd.xlane.f32.xlu0 %v53
    %v60 = vpop.xlane.xlu0 %59
    %61 = vadd.xlane.f32.xlu0 %v54
    %v62 = vpop.xlane.xlu0 %61
    %vm63 = vcmask 7168
    %64 = vst.msk [vmem:[%s2] sm:$0xff] %vm63, %v56
    %65 = vst.msk [vmem:[%s2 + $0x8] sm:$0xff] %vm63, %v58
    %66 = vst.msk [vmem:[%s2 + $0x10] sm:$0xff] %vm63, %v60
    %67 = vst.msk [vmem:[%s2 + $0x18] sm:$0xff] %vm63, %v62
    // Predicated region
    $region18: #{tpu_custom_call.1} parent=1 // pred_check
      _
    $region19: #{tpu_custom_call.1} parent=1 // pred_check_branch
      %69 = sbr.rel (0) target = $region21
    $region20: #{tpu_custom_call.1} parent=1 // pred_region
      _
    $region21: #{tpu_custom_call.1} parent=1 // pred_fallthru
      _
    // Predicated region
    $region22: #{tpu_custom_call.1} parent=1 // pred_check
      _
    $region23: #{tpu_custom_call.1} parent=1 // pred_check_branch
      %71 = sbr.rel (0) target = $region25
    $region24: #{tpu_custom_call.1} parent=1 // pred_region
      _
    $region25: #{tpu_custom_call.1} parent=1 // pred_fallthru
      _
    %72 = vsyncpa [#allocation3], 1
    %73 = vsyncpa [#allocation5], 1

</llo_original>
